<compile_context>
chip_gen: v7x
topology: tpu7x:2x2x1
jax: 0.10.0
libtpu: 0.0.40
codegen_flags: <defaults>
</compile_context>

<pallas_src>
import functools

import jax
import jax.numpy as jnp
from jax.experimental import pallas as pl
from jax.experimental.pallas import tpu as pltpu


_VMEM_LIMIT_BYTES = 32 * 1024 * 1024   # default scoped limit; kernel is HBM-bound
_BLOCK_BYTES_BUDGET = 2 * 1024 * 1024  # live bytes per block (in + out + f32 temps)
_MIN_BLOCK_BYTES = 512 * 1024          # keep ~0.35us/grid-step overhead amortized
_MIN_GRID_STEPS = 4                    # >= 2x TensorCores on v7x, enables pipelining


def _sublane_multiple(dtype):
    # Sublane packing: f32 -> 8 rows/vreg, bf16 -> 16, int8/fp8 -> 32.
    return max(8, 32 // jnp.dtype(dtype).itemsize)


def _batch_tile(batch, n, dtype):
    """Batch rows per grid step.

    Targets >= _MIN_GRID_STEPS grid steps (pipelining + v7x megacore) while
    keeping each tile above _MIN_BLOCK_BYTES and below _BLOCK_BYTES_BUDGET,
    rounded down to the packed-dtype sublane multiple.
    """
    sub = _sublane_multiple(dtype)
    itemsize = jnp.dtype(dtype).itemsize
    # Per batch-row live bytes: input tile + output tile + f32 intermediates.
    row_bytes = n * (2 * itemsize + 4)
    rows_budget = max(1, _BLOCK_BYTES_BUDGET // row_bytes)
    rows_floor = max(1, _MIN_BLOCK_BYTES // row_bytes)
    rows_split = pl.cdiv(batch, _MIN_GRID_STEPS)
    tb = min(rows_budget, max(rows_floor, rows_split))
    if tb >= batch:
        return batch
    return max(sub, (tb // sub) * sub)


def _radix_softmax_kernel(x_ref, o_ref, *, radix, groups, r):
    # x_ref / o_ref: (TB, C) with C = groups * radix * r.
    #   input  channel order (PyTorch contiguous view): c = g*radix*r + k*r + rr
    #   output channel order (after transpose(1, 2)):   c = k*groups*r + g*r + rr
    # One dense tile load; softmax over k is a statically unrolled elementwise
    # max/sum over lane slices of the register value (VPU only, no sublane
    # reduce, no transpose); one dense permuted full-row store at the end.
    x = x_ref[...].astype(jnp.float32)

    probs = [[None] * groups for _ in range(radix)]
    for g in range(groups):
        base = g * radix * r
        xs = [x[:, base + k * r: base + (k + 1) * r] for k in range(radix)]
        m = xs[0]
        for k in range(1, radix):
            m = jnp.maximum(m, xs[k])
        es = [jnp.exp(xk - m) for xk in xs]
        s = es[0]
        for k in range(1, radix):
            s = s + es[k]
        inv = 1.0 / s          # exact reciprocal (rows sum to 1 at f32 precision)
        for k in range(radix):
            probs[k][g] = es[k] * inv

    # Assemble the (k, g)-permuted row in registers -> single dense, unmasked
    # full-width store per sublane group.
    row = jnp.concatenate(
        [probs[k][g] for k in range(radix) for g in range(groups)], axis=-1)
    o_ref[...] = row.astype(o_ref.dtype)


def rsoftmax(x, radix, groups):
    """JAX/Pallas equivalent of RSoftmax.forward.

    x: array whose leading dim is batch (e.g. (B, C, 1, 1) NCHW conv output).
    Returns (B, -1) probabilities if radix > 1, else sigmoid(x) with the
    original shape (matching the PyTorch module).
    """
    batch = x.shape[0]
    n = x.size // batch

    if radix <= 1:
        # Elementwise sigmoid: returned directly so XLA fuses it into the
        # producing 1x1 conv instead of paying an extra HBM read + write
        # through a standalone kernel (perf-review recommendation).
        return jax.nn.sigmoid(x)

    r = n // (groups * radix)
    assert groups * radix * r == n, "channels must equal groups * radix * r"
    flat = x.reshape(batch, n)              # contiguous view, no transpose
    tb = _batch_tile(batch, n, flat.dtype)
    return pl.pallas_call(
        functools.partial(_radix_softmax_kernel,
                          radix=radix, groups=groups, r=r),
        out_shape=jax.ShapeDtypeStruct((batch, n), flat.dtype),
        grid=(pl.cdiv(batch, tb),),
        in_specs=[pl.BlockSpec((tb, n), lambda i: (i, 0))],
        out_specs=pl.BlockSpec((tb, n), lambda i: (i, 0)),
        compiler_params=pltpu.CompilerParams(
            dimension_semantics=("parallel",),
            vmem_limit_bytes=_VMEM_LIMIT_BYTES,
        ),
    )(flat)


def _reference_rsoftmax(x, radix, groups):
    # Pure-JAX reference mirroring the PyTorch forward.
    batch = x.shape[0]
    if radix > 1:
        r = (x.size // batch) // (groups * radix)
        xr = x.reshape(batch, groups, radix, r).transpose(0, 2, 1, 3)
        xr = jax.nn.softmax(xr, axis=1)
        return xr.reshape(batch, -1)
    return jax.nn.sigmoid(x)


if __name__ == "__main__":
    key = jax.random.PRNGKey(0)
    k1, k2, k3, k4 = jax.random.split(key, 4)

    # Typical ResNeSt usage: x comes from a 1x1 conv with output (B, C, 1, 1),
    # where C = radix * groups * r.
    radix, groups = 2, 2
    B, C = 2, 16                       # r = 4
    x = jax.random.normal(k1, (B, C, 1, 1), dtype=jnp.float32)
    out = jax.block_until_ready(rsoftmax(x, radix, groups))
    ref = _reference_rsoftmax(x, radix, groups)
    assert out.shape == (B, C), out.shape
    assert jnp.allclose(out, ref, atol=1e-5, rtol=1e-5), "radix>1 path mismatch"

    # Wider-lane case (r = 32), closer to real ResNeSt widths.
    B2, C2 = 4, 128                    # radix=2, groups=2 -> r = 32
    x2 = jax.random.normal(k2, (B2, C2, 1, 1), dtype=jnp.float32)
    out2 = jax.block_until_ready(rsoftmax(x2, radix, groups))
    ref2 = _reference_rsoftmax(x2, radix, groups)
    assert out2.shape == (B2, C2), out2.shape
    assert jnp.allclose(out2, ref2, atol=1e-5, rtol=1e-5), "wide radix>1 mismatch"

    # Larger batch / wider channels: exercises the multi-step grid
    # (pipelined double-buffering, megacore-shardable on v7x): tb = 8 -> 4 steps.
    B3, C3, radix3, groups3 = 32, 4096, 2, 8      # r = 256
    x3 = jax.random.normal(k3, (B3, C3, 1, 1), dtype=jnp.float32)
    out3 = jax.block_until_ready(rsoftmax(x3, radix3, groups3))
    ref3 = _reference_rsoftmax(x3, radix3, groups3)
    assert out3.shape == (B3, C3), out3.shape
    assert jnp.allclose(out3, ref3, atol=1e-5, rtol=1e-5), "tiled radix>1 mismatch"

    # radix == 1 path (plain sigmoid; left to XLA for producer fusion).
    x4 = jax.random.normal(k4, (B, C, 1, 1), dtype=jnp.float32)
    out4 = jax.block_until_ready(rsoftmax(x4, 1, groups))
    ref4 = _reference_rsoftmax(x4, 1, groups)
    assert out4.shape == x4.shape, out4.shape
    assert jnp.allclose(out4, ref4, atol=1e-5, rtol=1e-5), "radix==1 path mismatch"

    print("KERNEL_OK")
</pallas_src>

<mosaic_0001>
module attributes {stable_mosaic.version = 11 : i64} {
  func.func @_radix_softmax_kernel(%arg0: i32, %arg1: memref<2x16xf32, #tpu.memory_space<vmem>>, %arg2: memref<2x16xf32, #tpu.memory_space<vmem>>) attributes {dimension_semantics = [#tpu.dimension_semantics<parallel>], iteration_bounds = array<i64: 1>, scalar_prefetch = 0 : i64, scratch_operands = 0 : i64, tpu.core_type = #tpu.core_type<tc>, window_params = [{transform_indices = @transform_0, window_bounds = array<i64: 2, 16>}, {transform_indices = @transform_1, window_bounds = array<i64: 2, 16>}]} {
    %c0 = arith.constant 0 : index
    %c0_0 = arith.constant 0 : index
    %0 = vector.load %arg1[%c0, %c0_0] : memref<2x16xf32, #tpu.memory_space<vmem>>, vector<2x16xf32>
    %1 = vector.extract_strided_slice %0 {offsets = [0, 0], sizes = [2, 4], strides = [1, 1]} : vector<2x16xf32> to vector<2x4xf32>
    %2 = vector.extract_strided_slice %0 {offsets = [0, 4], sizes = [2, 4], strides = [1, 1]} : vector<2x16xf32> to vector<2x4xf32>
    %3 = arith.maximumf %1, %2 : vector<2x4xf32>
    %4 = arith.subf %1, %3 : vector<2x4xf32>
    %5 = math.exp %4 : vector<2x4xf32>
    %6 = arith.subf %2, %3 : vector<2x4xf32>
    %7 = math.exp %6 : vector<2x4xf32>
    %8 = arith.addf %5, %7 : vector<2x4xf32>
    %cst = arith.constant 1.000000e+00 : f32
    %9 = vector.broadcast %cst : f32 to vector<2x4xf32>
    %10 = arith.divf %9, %8 : vector<2x4xf32>
    %11 = arith.mulf %5, %10 : vector<2x4xf32>
    %12 = arith.mulf %7, %10 : vector<2x4xf32>
    %13 = vector.extract_strided_slice %0 {offsets = [0, 8], sizes = [2, 4], strides = [1, 1]} : vector<2x16xf32> to vector<2x4xf32>
    %14 = vector.extract_strided_slice %0 {offsets = [0, 12], sizes = [2, 4], strides = [1, 1]} : vector<2x16xf32> to vector<2x4xf32>
    %15 = arith.maximumf %13, %14 : vector<2x4xf32>
    %16 = arith.subf %13, %15 : vector<2x4xf32>
    %17 = math.exp %16 : vector<2x4xf32>
    %18 = arith.subf %14, %15 : vector<2x4xf32>
    %19 = math.exp %18 : vector<2x4xf32>
    %20 = arith.addf %17, %19 : vector<2x4xf32>
    %cst_1 = arith.constant 1.000000e+00 : f32
    %21 = vector.broadcast %cst_1 : f32 to vector<2x4xf32>
    %22 = arith.divf %21, %20 : vector<2x4xf32>
    %23 = arith.mulf %17, %22 : vector<2x4xf32>
    %24 = arith.mulf %19, %22 : vector<2x4xf32>
    %25 = tpu.concatenate %11, %23, %12, %24 in 1 : vector<2x4xf32>, vector<2x4xf32>, vector<2x4xf32>, vector<2x4xf32> -> vector<2x16xf32>
    %c0_2 = arith.constant 0 : index
    %c0_3 = arith.constant 0 : index
    %26 = vector.load %arg2[%c0_2, %c0_3] : memref<2x16xf32, #tpu.memory_space<vmem>>, vector<2x16xf32>
    tpu.vector_store %arg2[%c0_2, %c0_3], %25 {strides = array<i32>} : memref<2x16xf32, #tpu.memory_space<vmem>>, vector<2x16xf32>,
    return
  }
  func.func @transform_0(%arg0: i32) -> (i32, i32) {
    %c0_i32 = arith.constant 0 : i32
    %c0_i32_0 = arith.constant 0 : i32
    return %arg0, %c0_i32 : i32, i32
  }
  func.func @transform_1(%arg0: i32) -> (i32, i32) {
    %c0_i32 = arith.constant 0 : i32
    %c0_i32_0 = arith.constant 0 : i32
    return %arg0, %c0_i32 : i32, i32
  }
}

</mosaic_0001>

<llo_original>
// kernel: tpu_custom_call.1
$region0: #{tpu_custom_call.1}
  #allocation0 [shape = 'u32[]', space=smem, size = 0x4, offset = 0x4, fixed_abs, tag = 'smem constant byte address 0x4 - core index']
  #allocation1 [shape = 'u32[144,128]{1,0:T(1,128)}', space=vmem, size = 0x12000, scoped, tag = 'internal scratch']
  %s0 = inlined_call_operand.hbm [shape: f32[2,16], index: 0, kind: input, shape index: {}]
  %s1 = inlined_call_operand.hbm [shape: f32[2,16], index: 1, kind: output, shape index: {}]
  %s2 = sld [smem:[#allocation0]]
  $region18: #{tpu_custom_call.1} parent=0
    _
  %s4 = ssub.s32 1, %s2
  %s5 = scalar_select 0, %s4, %s2
  $region1: #{tpu_custom_call.1} parent=0
    #allocation2 [shape = 'u8[1024]{0}', space=vmem, size = 0x400, scoped, tag = 'input window, operand 0, single buffered']
    #allocation3 [shape = 's32[1]{0}', space=sflag, size = 0x4, scoped, tag = 'scoped memory for tpu_custom_call.1']
    #allocation4 [shape = 's32[1]{0}', space=sflag, size = 0x4, scoped, tag = 'scoped memory for tpu_custom_call.1']
    #allocation5 [shape = 'u8[1024]{0}', space=vmem, size = 0x400, scoped, tag = 'output window, operand 0, single buffered']
    %6 = vsyncpa [#allocation3], 0
    %7 = vsyncpa [#allocation4], 0
    // Predicated region
    $region2: #{tpu_custom_call.1} parent=1 // pred_check
      _
    $region3: #{tpu_custom_call.1} parent=1 // pred_check_branch
      %9 = sbr.rel (0) target = $region5
    $region4: #{tpu_custom_call.1} parent=1 // pred_region
      %s11 = ssub.s32 32, 32
      %12 = vsyncadd [#allocation3], %s11
      %s14 = sshll.u32 [#allocation2], 4
      %s15 = int_to_ptr.vmem [resolvable:$true] %s14
      %17 = dma.hbm_to_vmem [thread:$0]  %s0, 32, %s15, [#allocation3]
    $region5: #{tpu_custom_call.1} parent=1 // pred_fallthru
      _
    // Predicated region
    $region6: #{tpu_custom_call.1} parent=1 // pred_check
      _
    $region7: #{tpu_custom_call.1} parent=1 // pred_check_branch
      %19 = sbr.rel (0) target = $region9
    $region8: #{tpu_custom_call.1} parent=1 // pred_region
      %20 = dma.done [#allocation3], 32
    $region9: #{tpu_custom_call.1} parent=1 // pred_fallthru
      _
    %v21 = vld [vmem:[#allocation2] sm:$0x3]
    %23 = vrot.lane.b32.xlu0 %v21, 124
    %v24 = vpop.permute.xlu0 %23
    %v26 = vmax.f32 %v21, %v24
    %v27 = vsub.f32 %v21, %v26
    %v28 = vmul.f32 %v27, 1.442695
    %v29 = vpow.pop %v28
    %31 = vrot.lane.b32.xlu0 %v26, 4
    %v32 = vpop.permute.xlu0 %31
    %v34 = vsub.f32 %v21, %v32
    %v35 = vmul.f32 %v34, 1.442695
    %v36 = vpow.pop %v35
    %38 = vrot.lane.b32.xlu0 %v36, 124
    %v39 = vpop.permute.xlu0 %38
    %v41 = vadd.f32 %v29, %v39
    %v42 = vrcp.pop %v41
    %v43 = vmul.f32 1.0, %v42
    %v44 = vmul.f32 %v29, %v43
    %46 = vrot.lane.b32.xlu0 %v43, 4
    %v47 = vpop.permute.xlu0 %46
    %v49 = vmul.f32 %v36, %v47
    %51 = vrot.lane.b32.xlu0 %v44, 124
    %v52 = vpop.permute.xlu0 %51
    %55 = vrot.lane.b32.xlu0 %v49, 4
    %v56 = vpop.permute.xlu0 %55
    %vm58 = vcmask 31744
    %v59 = vsel %vm58, %v44, %v52
    %vm60 = vcmask 64512
    %v61 = vsel %vm60, %v59, %v56
    %vm62 = vcmask 97280
    %v63 = vsel %vm62, %v61, %v49
    %vm64 = vcmask 123904
    %65 = vst.msk [vmem:[#allocation5] sm:$0x3] %vm64, %v63
    // Predicated region
    $region10: #{tpu_custom_call.1} parent=1 // pred_check
      _
    $region11: #{tpu_custom_call.1} parent=1 // pred_check_branch
      %67 = sbr.rel (0) target = $region13
    $region12: #{tpu_custom_call.1} parent=1 // pred_region
      %s69 = ssub.s32 32, 32
      %70 = vsyncadd [#allocation4], %s69
      %s72 = sshll.u32 [#allocation5], 4
      %s73 = int_to_ptr.vmem [resolvable:$true] %s72
      %75 = dma.vmem_to_hbm [thread:$0]  %s73, 32, %s1, [#allocation4]
    $region13: #{tpu_custom_call.1} parent=1 // pred_fallthru
      _
    // Predicated region
    $region14: #{tpu_custom_call.1} parent=1 // pred_check
      _
    $region15: #{tpu_custom_call.1} parent=1 // pred_check_branch
      %77 = sbr.rel (0) target = $region17
    $region16: #{tpu_custom_call.1} parent=1 // pred_region
      %78 = dma.done [#allocation4], 32
    $region17: #{tpu_custom_call.1} parent=1 // pred_fallthru
      _
    %79 = vsyncpa [#allocation3], 1
    %80 = vsyncpa [#allocation4], 1

</llo_original>
